<compile_context>
chip_gen: v7x
topology: tpu7x:2x2x1
jax: 0.10.0
libtpu: 0.0.40
codegen_flags: <defaults>
</compile_context>

<pallas_src>
import functools

import numpy as np
import jax
import jax.numpy as jnp
from jax.experimental import pallas as pl
from jax.experimental.pallas import tpu as pltpu

# ---------------- model config (small, consistent with the module) ------------
N_MINI = 3        # n
INPUT_DIM = 16
HIDDEN_DIM = 32
OUTPUT_DIM = 8
BATCH = 2

LANE = 128            # TPU lane width: padded feature width inside the kernel
SUBLANE = 8           # f32 sublane width: batch padded to a multiple of this
ONES_LANE = LANE - 1  # activation lane carrying the constant 1.0 (bias lane)
MAX_TB = 1024         # max batch-tile rows (review: 512-1024 is the sweet spot)


def _round_up(x, m):
    return (x + m - 1) // m * m


# ------------------------------- kernel ---------------------------------------
def bigger_nn_kernel(x_ref, w_ref, out_ref, h_ref, *, n, d_in, d_out):
    """Folded network: n dots + ReLU, then one output dot.

    x_ref:   (TB, d_in)         natural-width input block (f32)
    w_ref:   (n + 1, 128, 128)  folded + padded weights (f32 or bf16), bias in row 127
    out_ref: (TB, d_out)        natural-width output block (f32)
    h_ref:   (TB, 128) f32      VMEM scratch: activation slab with bias lane
    """
    cdt = w_ref.dtype  # MXU operand dtype (bf16 on v6e/v7x, f32 also fine)
    tb = h_ref.shape[0]

    # Build the 128-lane activation slab in VMEM:
    #   lanes [0:d_in] = x, lane 127 = 1.0 (bias lane), everything else 0.
    lane = jax.lax.broadcasted_iota(jnp.int32, (tb, LANE), 1)
    h_ref[...] = jnp.where(lane == ONES_LANE, jnp.float32(1.0), jnp.float32(0.0))
    h_ref[:, :d_in] = x_ref[...]

    h = h_ref[...].astype(cdt)
    for l in range(n):  # n is static -> unrolled at trace time
        # f32 accumulation + f32 ReLU (v5e VPU has no bf16), cast back for the MXU.
        h = jnp.maximum(
            jnp.dot(h, w_ref[l], preferred_element_type=jnp.float32), 0.0
        ).astype(cdt)
    out = jnp.dot(h, w_ref[n], preferred_element_type=jnp.float32)
    out_ref[...] = out[:, :d_out].astype(out_ref.dtype)


# ------------------------- param folding / packing ----------------------------
def fold_and_pack_params(params, *, n, dtype=jnp.bfloat16):
    """Fold ReLU-free adjacent Linears (in float64) and pack everything into one
    (n+1, 128, 128) buffer of `dtype`. Bias lives in row ONES_LANE of each matrix;
    element [ONES_LANE, ONES_LANE] = 1 propagates the ones-lane through layers.

    Call this ONCE per parameter set (it is host-side numpy work) and reuse the
    returned device array for every forward call."""
    assert n >= 1, "folding below assumes at least one MiniNN block"
    w_in, b_in, w1s, b1s, w2s, b2s, w_out, b_out = [
        np.asarray(p, np.float64) for p in params]

    # Bias lane / bias row must not collide with a real feature.
    d_in, hidden = w_in.shape
    d_out = w_out.shape[1]
    assert d_in < LANE and hidden < LANE and d_out < LANE, (
        "bias-lane scheme requires all feature dims < 128")

    mats, biases = [], []
    # input_layer folded into block-0 fc1
    mats.append(w_in @ w1s[0])
    biases.append(b_in @ w1s[0] + b1s[0])
    # block i-1 fc2 folded into block i fc1
    for i in range(1, n):
        mats.append(w2s[i - 1] @ w1s[i])
        biases.append(b2s[i - 1] @ w1s[i] + b1s[i])
    # last fc2 folded into the output layer
    mats.append(w2s[n - 1] @ w_out)
    biases.append(b2s[n - 1] @ w_out + b_out)

    packed = np.zeros((n + 1, LANE, LANE), np.float64)
    for l in range(n + 1):
        din, dout = mats[l].shape
        packed[l, :din, :dout] = mats[l]
        packed[l, ONES_LANE, :dout] = biases[l][0]
        packed[l, ONES_LANE, ONES_LANE] = 1.0
    return jnp.asarray(packed, dtype)


# ------------------------------- wrapper ---------------------------------------
@functools.partial(jax.jit, static_argnames=("n", "d_out"))
def bigger_nn_forward(x, w_all, *, n, d_out):
    """x: (B, INPUT_DIM) f32, w_all: packed (n+1,128,128) weights (from
    fold_and_pack_params, computed once) -> (B, OUTPUT_DIM) f32."""
    B, d_in = x.shape

    # One tile for B <= MAX_TB; otherwise MAX_TB-row tiles pipelined over HBM and
    # sharded across TensorCores via dimension_semantics=("parallel",).
    tb = min(_round_up(B, SUBLANE), MAX_TB)
    b_pad = _round_up(B, tb)

    # On-device batch padding (fused under jit; no host sync).
    x_pad = jnp.pad(x, ((0, b_pad - B), (0, 0)))

    out_pad = pl.pallas_call(
        functools.partial(bigger_nn_kernel, n=n, d_in=d_in, d_out=d_out),
        out_shape=jax.ShapeDtypeStruct((b_pad, d_out), jnp.float32),
        grid=(b_pad // tb,),
        in_specs=[
            # activations at natural width (last dim == full array dim -> legal),
            # pipelined over the batch grid
            pl.BlockSpec((tb, d_in), lambda i: (i, 0)),
            # folded weights: constant block index -> resident across the grid
            pl.BlockSpec((n + 1, LANE, LANE), lambda i: (0, 0, 0)),
        ],
        # natural-width output (16x fewer HBM write bytes than a 128-lane slab)
        out_specs=pl.BlockSpec((tb, d_out), lambda i: (i, 0)),
        scratch_shapes=[pltpu.VMEM((tb, LANE), jnp.float32)],
        compiler_params=pltpu.CompilerParams(
            dimension_semantics=("parallel",)),
    )(x_pad, w_all)

    return out_pad[:B]


# --------------------------- init + reference ----------------------------------
def init_params(key, n, input_dim, output_dim, hidden_dim):
    """Deterministic synthetic parameters. Weights stored as (in, out)."""
    def linear(k, din, dout):
        kw, kb = jax.random.split(k)
        bound = 1.0 / jnp.sqrt(din)
        w = jax.random.uniform(kw, (din, dout), jnp.float32, -bound, bound)
        b = jax.random.uniform(kb, (1, dout), jnp.float32, -bound, bound)
        return w, b

    keys = jax.random.split(key, 2 + 2 * n)
    w_in, b_in = linear(keys[0], input_dim, hidden_dim)

    w1_list, b1_list, w2_list, b2_list = [], [], [], []
    for i in range(n):
        w1, b1 = linear(keys[1 + 2 * i], hidden_dim, hidden_dim)
        w2, b2 = linear(keys[2 + 2 * i], hidden_dim, hidden_dim)
        w1_list.append(w1); b1_list.append(b1)
        w2_list.append(w2); b2_list.append(b2)

    w1s = jnp.stack(w1_list)                       # (n, H, H)
    b1s = jnp.stack(b1_list)                       # (n, 1, H)
    w2s = jnp.stack(w2_list)                       # (n, H, H)
    b2s = jnp.stack(b2_list)                       # (n, 1, H)

    w_out, b_out = linear(keys[1 + 2 * n], hidden_dim, output_dim)
    return (w_in, b_in, w1s, b1s, w2s, b2s, w_out, b_out)


def reference_forward(x, params, *, n):
    """Plain-JAX reference matching the PyTorch forward (unfolded)."""
    (w_in, b_in, w1s, b1s, w2s, b2s, w_out, b_out) = params
    h = x @ w_in + b_in
    for i in range(n):
        h1 = jnp.maximum(h @ w1s[i] + b1s[i], 0.0)
        h = h1 @ w2s[i] + b2s[i]
    return h @ w_out + b_out


if __name__ == "__main__":
    key = jax.random.PRNGKey(0)
    kx, kp = jax.random.split(key)

    x = jax.random.normal(kx, (BATCH, INPUT_DIM), jnp.float32)
    params = init_params(kp, N_MINI, INPUT_DIM, OUTPUT_DIM, HIDDEN_DIM)
    ref = reference_forward(x, params, n=N_MINI)

    # Fold + pack ONCE (hoisted out of the forward path; cache with the params).
    w_f32 = fold_and_pack_params(params, n=N_MINI, dtype=jnp.float32)
    w_bf16 = fold_and_pack_params(params, n=N_MINI, dtype=jnp.bfloat16)

    # f32-operand path (exact reference match modulo folding reorder).
    out_f32 = jax.block_until_ready(
        bigger_nn_forward(x, w_f32, n=N_MINI, d_out=OUTPUT_DIM))
    # bf16-operand path (native-rate MXU on v6e/v7x, f32 accumulation).
    out_bf16 = jax.block_until_ready(
        bigger_nn_forward(x, w_bf16, n=N_MINI, d_out=OUTPUT_DIM))

    assert out_f32.shape == (BATCH, OUTPUT_DIM), out_f32.shape
    assert out_bf16.shape == (BATCH, OUTPUT_DIM), out_bf16.shape
    # Layer folding changes summation order slightly -> mildly looser tolerance.
    assert jnp.allclose(out_f32, ref, atol=2e-4, rtol=2e-4), "f32 mismatch vs reference"
    # bf16 operands (f32 accumulation) -> bf16-level tolerance.
    assert jnp.allclose(out_bf16, ref, atol=5e-2, rtol=5e-2), "bf16 mismatch vs reference"

    print("KERNEL_OK")
</pallas_src>

<mosaic_0001>
module attributes {stable_mosaic.version = 11 : i64} {
  func.func @bigger_nn_kernel(%arg0: i32, %arg1: memref<8x16xf32, #tpu.memory_space<vmem>>, %arg2: memref<4x128x128xf32, #tpu.memory_space<vmem>>, %arg3: memref<8x8xf32, #tpu.memory_space<vmem>>, %arg4: memref<8x128xf32, #tpu.memory_space<vmem>>) attributes {dimension_semantics = [#tpu.dimension_semantics<parallel>], iteration_bounds = array<i64: 1>, scalar_prefetch = 0 : i64, scratch_operands = 1 : i64, tpu.core_type = #tpu.core_type<tc>, window_params = [{transform_indices = @transform_0, window_bounds = array<i64: 8, 16>}, {pipeline_mode = #tpu.pipeline_mode<synchronous>, transform_indices = @transform_1, window_bounds = array<i64: 4, 128, 128>}, {transform_indices = @transform_2, window_bounds = array<i64: 8, 8>}]} {
    %0 = tpu.iota {dimensions = array<i32: 1>} : vector<8x128xi32>
    %c127_i32 = arith.constant 127 : i32
    %1 = vector.broadcast %c127_i32 : i32 to vector<8x128xi32>
    %2 = arith.cmpi eq, %0, %1 : vector<8x128xi32>
    %cst = arith.constant 1.000000e+00 : f32
    %cst_0 = arith.constant 0.000000e+00 : f32
    %3 = vector.broadcast %cst : f32 to vector<8x128xf32>
    %4 = vector.broadcast %cst_0 : f32 to vector<8x128xf32>
    %5 = arith.select %2, %3, %4 : vector<8x128xi1>, vector<8x128xf32>
    %c0 = arith.constant 0 : index
    %c0_1 = arith.constant 0 : index
    %6 = vector.load %arg4[%c0, %c0_1] : memref<8x128xf32, #tpu.memory_space<vmem>>, vector<8x128xf32>
    tpu.vector_store %arg4[%c0, %c0_1], %5 {strides = array<i32>} : memref<8x128xf32, #tpu.memory_space<vmem>>, vector<8x128xf32>,
    %c0_2 = arith.constant 0 : index
    %c0_3 = arith.constant 0 : index
    %7 = vector.load %arg1[%c0_2, %c0_3] : memref<8x16xf32, #tpu.memory_space<vmem>>, vector<8x16xf32>
    %c0_4 = arith.constant 0 : index
    %c0_5 = arith.constant 0 : index
    %8 = vector.load %arg4[%c0_4, %c0_5] : memref<8x128xf32, #tpu.memory_space<vmem>>, vector<8x16xf32>
    tpu.vector_store %arg4[%c0_4, %c0_5], %7 {strides = array<i32>} : memref<8x128xf32, #tpu.memory_space<vmem>>, vector<8x16xf32>,
    %c0_6 = arith.constant 0 : index
    %c0_7 = arith.constant 0 : index
    %9 = vector.load %arg4[%c0_6, %c0_7] : memref<8x128xf32, #tpu.memory_space<vmem>>, vector<8x128xf32>
    %c0_8 = arith.constant 0 : index
    %c0_9 = arith.constant 0 : index
    %c0_10 = arith.constant 0 : index
    %10 = vector.load %arg2[%c0_8, %c0_9, %c0_10] : memref<4x128x128xf32, #tpu.memory_space<vmem>>, vector<1x128x128xf32>
    %11 = vector.shape_cast %10 : vector<1x128x128xf32> to vector<128x128xf32>
    %cst_11 = arith.constant dense<0.000000e+00> : vector<8x128xf32>
    %12 = tpu.matmul %9, %11, %cst_11 {dimension_numbers = #tpu.dot_dimension_numbers<[1], [0], [0], [1], [0, 0, 1, 1], [], []>} : vector<8x128xf32>, vector<128x128xf32>, vector<8x128xf32> -> vector<8x128xf32>
    %cst_12 = arith.constant 0.000000e+00 : f32
    %13 = vector.broadcast %cst_12 : f32 to vector<8x128xf32>
    %14 = arith.maximumf %12, %13 : vector<8x128xf32>
    %c1 = arith.constant 1 : index
    %c0_13 = arith.constant 0 : index
    %c0_14 = arith.constant 0 : index
    %15 = vector.load %arg2[%c1, %c0_13, %c0_14] : memref<4x128x128xf32, #tpu.memory_space<vmem>>, vector<1x128x128xf32>
    %16 = vector.shape_cast %15 : vector<1x128x128xf32> to vector<128x128xf32>
    %cst_15 = arith.constant dense<0.000000e+00> : vector<8x128xf32>
    %17 = tpu.matmul %14, %16, %cst_15 {dimension_numbers = #tpu.dot_dimension_numbers<[1], [0], [0], [1], [0, 0, 1, 1], [], []>} : vector<8x128xf32>, vector<128x128xf32>, vector<8x128xf32> -> vector<8x128xf32>
    %cst_16 = arith.constant 0.000000e+00 : f32
    %18 = vector.broadcast %cst_16 : f32 to vector<8x128xf32>
    %19 = arith.maximumf %17, %18 : vector<8x128xf32>
    %c2 = arith.constant 2 : index
    %c0_17 = arith.constant 0 : index
    %c0_18 = arith.constant 0 : index
    %20 = vector.load %arg2[%c2, %c0_17, %c0_18] : memref<4x128x128xf32, #tpu.memory_space<vmem>>, vector<1x128x128xf32>
    %21 = vector.shape_cast %20 : vector<1x128x128xf32> to vector<128x128xf32>
    %cst_19 = arith.constant dense<0.000000e+00> : vector<8x128xf32>
    %22 = tpu.matmul %19, %21, %cst_19 {dimension_numbers = #tpu.dot_dimension_numbers<[1], [0], [0], [1], [0, 0, 1, 1], [], []>} : vector<8x128xf32>, vector<128x128xf32>, vector<8x128xf32> -> vector<8x128xf32>
    %cst_20 = arith.constant 0.000000e+00 : f32
    %23 = vector.broadcast %cst_20 : f32 to vector<8x128xf32>
    %24 = arith.maximumf %22, %23 : vector<8x128xf32>
    %c3 = arith.constant 3 : index
    %c0_21 = arith.constant 0 : index
    %c0_22 = arith.constant 0 : index
    %25 = vector.load %arg2[%c3, %c0_21, %c0_22] : memref<4x128x128xf32, #tpu.memory_space<vmem>>, vector<1x128x128xf32>
    %26 = vector.shape_cast %25 : vector<1x128x128xf32> to vector<128x128xf32>
    %cst_23 = arith.constant dense<0.000000e+00> : vector<8x128xf32>
    %27 = tpu.matmul %24, %26, %cst_23 {dimension_numbers = #tpu.dot_dimension_numbers<[1], [0], [0], [1], [0, 0, 1, 1], [], []>} : vector<8x128xf32>, vector<128x128xf32>, vector<8x128xf32> -> vector<8x128xf32>
    %28 = vector.extract_strided_slice %27 {offsets = [0, 0], sizes = [8, 8], strides = [1, 1]} : vector<8x128xf32> to vector<8x8xf32>
    %c0_24 = arith.constant 0 : index
    %c0_25 = arith.constant 0 : index
    %29 = vector.load %arg3[%c0_24, %c0_25] : memref<8x8xf32, #tpu.memory_space<vmem>>, vector<8x8xf32>
    tpu.vector_store %arg3[%c0_24, %c0_25], %28 {strides = array<i32>} : memref<8x8xf32, #tpu.memory_space<vmem>>, vector<8x8xf32>,
    return
  }
  func.func @transform_0(%arg0: i32) -> (i32, i32) {
    %c0_i32 = arith.constant 0 : i32
    %c0_i32_0 = arith.constant 0 : i32
    return %arg0, %c0_i32 : i32, i32
  }
  func.func @transform_1(%arg0: i32) -> (i32, i32, i32) {
    %c0_i32 = arith.constant 0 : i32
    %c0_i32_0 = arith.constant 0 : i32
    %c0_i32_1 = arith.constant 0 : i32
    %c0_i32_2 = arith.constant 0 : i32
    return %c0_i32, %c0_i32_0, %c0_i32_1 : i32, i32, i32
  }
  func.func @transform_2(%arg0: i32) -> (i32, i32) {
    %c0_i32 = arith.constant 0 : i32
    %c0_i32_0 = arith.constant 0 : i32
    return %arg0, %c0_i32 : i32, i32
  }
}

</mosaic_0001>

<llo_original>
// kernel: bigger_nn_forward.1
$region0: #{bigger_nn_forward.1}
  #allocation0 [shape = 'u32[]', space=smem, size = 0x4, offset = 0x4, fixed_abs, tag = 'smem constant byte address 0x4 - core index']
  #allocation1 [shape = 'u32[144,128]{1,0:T(1,128)}', space=vmem, size = 0x12000, scoped, tag = 'internal scratch']
  #allocation2 [shape = 'f32[8,128]{1,0:T(8,128)}', space=vmem, size = 0x1000, scoped, tag = 'scratch operand']
  %s0 = inlined_call_operand.vmem [shape: f32[8,16], index: 0, kind: input, shape index: {}]
  %s1 = inlined_call_operand.hbm [shape: f32[4,128,128], index: 1, kind: input, shape index: {}]
  %s2 = inlined_call_operand.vmem [shape: f32[8,8], index: 2, kind: output, shape index: {}]
  %s3 = sld [smem:[#allocation0]]
  $region22: #{bigger_nn_forward.1} parent=0
    _
  %s5 = ssub.s32 1, %s3
  %s6 = scalar_select 0, %s5, %s3
  $region1: #{bigger_nn_forward.1} parent=0
    #allocation3 [shape = 'u8[262144]{0}', space=vmem, size = 0x40000, scoped, tag = 'input window, operand 1, single buffered']
    #allocation4 [shape = 's32[1]{0}', space=sflag, size = 0x4, scoped, tag = 'scoped memory for bigger_nn_forward.1']
    %7 = vsyncpa [#allocation4], 0
    // Predicated region
    $region2: #{bigger_nn_forward.1} parent=1 // pred_check
      _
    $region3: #{bigger_nn_forward.1} parent=1 // pred_check_branch
      %9 = sbr.rel (0) target = $region5
    $region4: #{bigger_nn_forward.1} parent=1 // pred_region
      _
    $region5: #{bigger_nn_forward.1} parent=1 // pred_fallthru
      _
    // Predicated region
    $region6: #{bigger_nn_forward.1} parent=1 // pred_check
      _
    $region7: #{bigger_nn_forward.1} parent=1 // pred_check_branch
      %11 = sbr.rel (0) target = $region9
    $region8: #{bigger_nn_forward.1} parent=1 // pred_region
      %s13 = ssub.s32 8192, 8192
      %14 = vsyncadd [#allocation4], %s13
      %s15 = sshll.u32 [#allocation3], 4
      %s16 = int_to_ptr.vmem [resolvable:$true] %s15
      %21 = dma.hbm_to_vmem [thread:$0]  %s1, 8192, %s16, [#allocation4], 128, 128, 8
    $region9: #{bigger_nn_forward.1} parent=1 // pred_fallthru
      _
    // Predicated region
    $region10: #{bigger_nn_forward.1} parent=1 // pred_check
      _
    $region11: #{bigger_nn_forward.1} parent=1 // pred_check_branch
      %23 = sbr.rel (0) target = $region13
    $region12: #{bigger_nn_forward.1} parent=1 // pred_region
      %24 = dma.done [#allocation4], 8192
    $region13: #{bigger_nn_forward.1} parent=1 // pred_fallthru
      _
    %v25 = vlaneseq
    %v26 = vand.u32 %v25, 127
    %vm27 = vcmp.eq.s32.totalorder %v26, 127
    %v28 = vsel %vm27, 1.0, 0.0
    %29 = vst [vmem:[#allocation2] sm:$0xff] %v28
    %v30 = vld [vmem:[%s0] sm:$0xff]
    %vm31 = vcmask 130048
    %32 = vst.msk [vmem:[#allocation2] sm:$0xff] %vm31, %v30
    %v33 = vld [vmem:[#allocation2] sm:$0xff]
    %v34 = vld [vmem:[#allocation3] sm:$0xff]
    %v35 = vld [vmem:[#allocation3 + $0x8] sm:$0xff]
    %v36 = vld [vmem:[#allocation3 + $0x10] sm:$0xff]
    %v37 = vld [vmem:[#allocation3 + $0x18] sm:$0xff]
    %v38 = vld [vmem:[#allocation3 + $0x20] sm:$0xff]
    %v39 = vld [vmem:[#allocation3 + $0x28] sm:$0xff]
    %v40 = vld [vmem:[#allocation3 + $0x30] sm:$0xff]
    %v41 = vld [vmem:[#allocation3 + $0x38] sm:$0xff]
    %v42 = vld [vmem:[#allocation3 + $0x40] sm:$0xff]
    %v43 = vld [vmem:[#allocation3 + $0x48] sm:$0xff]
    %v44 = vld [vmem:[#allocation3 + $0x50] sm:$0xff]
    %v45 = vld [vmem:[#allocation3 + $0x58] sm:$0xff]
    %v46 = vld [vmem:[#allocation3 + $0x60] sm:$0xff]
    %v47 = vld [vmem:[#allocation3 + $0x68] sm:$0xff]
    %v48 = vld [vmem:[#allocation3 + $0x70] sm:$0xff]
    %v49 = vld [vmem:[#allocation3 + $0x78] sm:$0xff]
    %50 = vmatprep.subr.mxu0 0.0
    %51 = vmatpush1.msra.mxu0 %v34
    %52 = vmatprep.subr.mxu0 0.0
    %53 = vmatpush1.msra.mxu0 %v35
    %54 = vmatprep.subr.mxu0 0.0
    %55 = vmatpush1.msra.mxu0 %v36
    %56 = vmatprep.subr.mxu0 0.0
    %57 = vmatpush1.msra.mxu0 %v37
    %58 = vmatprep.subr.mxu0 0.0
    %59 = vmatpush1.msra.mxu0 %v38
    %60 = vmatprep.subr.mxu0 0.0
    %61 = vmatpush1.msra.mxu0 %v39
    %62 = vmatprep.subr.mxu0 0.0
    %63 = vmatpush1.msra.mxu0 %v40
    %64 = vmatprep.subr.mxu0 0.0
    %65 = vmatpush1.msra.mxu0 %v41
    %66 = vmatprep.subr.mxu0 0.0
    %67 = vmatpush1.msra.mxu0 %v42
    %68 = vmatprep.subr.mxu0 0.0
    %69 = vmatpush1.msra.mxu0 %v43
    %70 = vmatprep.subr.mxu0 0.0
    %71 = vmatpush1.msra.mxu0 %v44
    %72 = vmatprep.subr.mxu0 0.0
    %73 = vmatpush1.msra.mxu0 %v45
    %74 = vmatprep.subr.mxu0 0.0
    %75 = vmatpush1.msra.mxu0 %v46
    %76 = vmatprep.subr.mxu0 0.0
    %77 = vmatpush1.msra.mxu0 %v47
    %78 = vmatprep.subr.mxu0 0.0
    %79 = vmatpush1.msra.mxu0 %v48
    %80 = vmatprep.subr.mxu0 0.0
    %81 = vmatpush1.msra.mxu0 %v49
    %82 = vmatprep.subr.mxu0 0.0
    %83 = vmatpush1.msra.mxu0 0.0
    %84 = vmatprep.subr.mxu0 0.0
    %85 = vmatpush1.msra.mxu0 0.0
    %86 = vmatprep.subr.mxu0 0.0
    %87 = vmatpush1.msra.mxu0 0.0
    %88 = vmatprep.subr.mxu0 0.0
    %89 = vmatpush1.msra.mxu0 0.0
    %90 = vmatprep.subr.mxu0 0.0
    %91 = vmatpush1.msra.mxu0 0.0
    %92 = vmatprep.subr.mxu0 0.0
    %93 = vmatpush1.msra.mxu0 0.0
    %94 = vmatprep.subr.mxu0 0.0
    %95 = vmatpush1.msra.mxu0 0.0
    %96 = vmatprep.subr.mxu0 0.0
    %97 = vmatpush1.msra.mxu0 0.0
    %98 = vmatprep.subr.mxu0 0.0
    %99 = vmatpush1.msra.mxu0 0.0
    %100 = vmatprep.subr.mxu0 0.0
    %101 = vmatpush1.msra.mxu0 0.0
    %102 = vmatprep.subr.mxu0 0.0
    %103 = vmatpush1.msra.mxu0 0.0
    %104 = vmatprep.subr.mxu0 0.0
    %105 = vmatpush1.msra.mxu0 0.0
    %106 = vmatprep.subr.mxu0 0.0
    %107 = vmatpush1.msra.mxu0 0.0
    %108 = vmatprep.subr.mxu0 0.0
    %109 = vmatpush1.msra.mxu0 0.0
    %110 = vmatprep.subr.mxu0 0.0
    %111 = vmatpush1.msra.mxu0 0.0
    %112 = vmatprep.subr.mxu0 0.0
    %113 = vmatpush1.msra.mxu0 0.0
    %114 = vmatprep.mubr.f32.mxu0 0.0
    %115 = vmatmul.mubr.f32.gmra.mrb[0].mxu0 %v33
    %v116 = vpop.f32.mrb[0].mxu0
    %v117 = vadd.f32 0.0, %v116
    %v118 = vpop.f32.mrb[0].mxu0
    %119 = vdwg.mxu0
    %v120 = vmax.f32 %v117, 0.0
    %s121 = scalar_lea.vmem [#allocation3], 128
    %v122 = vld [vmem:[%s121] sm:$0xff]
    %v123 = vld [vmem:[%s121 + $0x8] sm:$0xff]
    %v124 = vld [vmem:[%s121 + $0x10] sm:$0xff]
    %v125 = vld [vmem:[%s121 + $0x18] sm:$0xff]
    %v126 = vld [vmem:[%s121 + $0x20] sm:$0xff]
    %v127 = vld [vmem:[%s121 + $0x28] sm:$0xff]
    %v128 = vld [vmem:[%s121 + $0x30] sm:$0xff]
    %v129 = vld [vmem:[%s121 + $0x38] sm:$0xff]
    %v130 = vld [vmem:[%s121 + $0x40] sm:$0xff]
    %v131 = vld [vmem:[%s121 + $0x48] sm:$0xff]
    %v132 = vld [vmem:[%s121 + $0x50] sm:$0xff]
    %v133 = vld [vmem:[%s121 + $0x58] sm:$0xff]
    %v134 = vld [vmem:[%s121 + $0x60] sm:$0xff]
    %v135 = vld [vmem:[%s121 + $0x68] sm:$0xff]
    %v136 = vld [vmem:[%s121 + $0x70] sm:$0xff]
    %v137 = vld [vmem:[%s121 + $0x78] sm:$0xff]
    %138 = vmatprep.subr.mxu0 0.0
    %139 = vmatpush1.msra.mxu0 %v122
    %140 = vmatprep.subr.mxu0 0.0
    %141 = vmatpush1.msra.mxu0 %v123
    %142 = vmatprep.subr.mxu0 0.0
    %143 = vmatpush1.msra.mxu0 %v124
    %144 = vmatprep.subr.mxu0 0.0
    %145 = vmatpush1.msra.mxu0 %v125
    %146 = vmatprep.subr.mxu0 0.0
    %147 = vmatpush1.msra.mxu0 %v126
    %148 = vmatprep.subr.mxu0 0.0
    %149 = vmatpush1.msra.mxu0 %v127
    %150 = vmatprep.subr.mxu0 0.0
    %151 = vmatpush1.msra.mxu0 %v128
    %152 = vmatprep.subr.mxu0 0.0
    %153 = vmatpush1.msra.mxu0 %v129
    %154 = vmatprep.subr.mxu0 0.0
    %155 = vmatpush1.msra.mxu0 %v130
    %156 = vmatprep.subr.mxu0 0.0
    %157 = vmatpush1.msra.mxu0 %v131
    %158 = vmatprep.subr.mxu0 0.0
    %159 = vmatpush1.msra.mxu0 %v132
    %160 = vmatprep.subr.mxu0 0.0
    %161 = vmatpush1.msra.mxu0 %v133
    %162 = vmatprep.subr.mxu0 0.0
    %163 = vmatpush1.msra.mxu0 %v134
    %164 = vmatprep.subr.mxu0 0.0
    %165 = vmatpush1.msra.mxu0 %v135
    %166 = vmatprep.subr.mxu0 0.0
    %167 = vmatpush1.msra.mxu0 %v136
    %168 = vmatprep.subr.mxu0 0.0
    %169 = vmatpush1.msra.mxu0 %v137
    %170 = vmatprep.subr.mxu0 0.0
    %171 = vmatpush1.msra.mxu0 0.0
    %172 = vmatprep.subr.mxu0 0.0
    %173 = vmatpush1.msra.mxu0 0.0
    %174 = vmatprep.subr.mxu0 0.0
    %175 = vmatpush1.msra.mxu0 0.0
    %176 = vmatprep.subr.mxu0 0.0
    %177 = vmatpush1.msra.mxu0 0.0
    %178 = vmatprep.subr.mxu0 0.0
    %179 = vmatpush1.msra.mxu0 0.0
    %180 = vmatprep.subr.mxu0 0.0
    %181 = vmatpush1.msra.mxu0 0.0
    %182 = vmatprep.subr.mxu0 0.0
    %183 = vmatpush1.msra.mxu0 0.0
    %184 = vmatprep.subr.mxu0 0.0
    %185 = vmatpush1.msra.mxu0 0.0
    %186 = vmatprep.subr.mxu0 0.0
    %187 = vmatpush1.msra.mxu0 0.0
    %188 = vmatprep.subr.mxu0 0.0
    %189 = vmatpush1.msra.mxu0 0.0
    %190 = vmatprep.subr.mxu0 0.0
    %191 = vmatpush1.msra.mxu0 0.0
    %192 = vmatprep.subr.mxu0 0.0
    %193 = vmatpush1.msra.mxu0 0.0
    %194 = vmatprep.subr.mxu0 0.0
    %195 = vmatpush1.msra.mxu0 0.0
    %196 = vmatprep.subr.mxu0 0.0
    %197 = vmatpush1.msra.mxu0 0.0
    %198 = vmatprep.subr.mxu0 0.0
    %199 = vmatpush1.msra.mxu0 0.0
    %200 = vmatprep.subr.mxu0 0.0
    %201 = vmatpush1.msra.mxu0 0.0
    %202 = vmatprep.mubr.f32.mxu0 0.0
    %203 = vmatmul.mubr.f32.gmra.mrb[0].mxu0 %v120
    %v204 = vpop.f32.mrb[0].mxu0
    %v205 = vadd.f32 0.0, %v204
    %v206 = vpop.f32.mrb[0].mxu0
    %207 = vdwg.mxu0
    %v208 = vmax.f32 %v205, 0.0
    %s209 = scalar_lea.vmem [#allocation3], 256
    %v210 = vld [vmem:[%s209] sm:$0xff]
    %v211 = vld [vmem:[%s209 + $0x8] sm:$0xff]
    %v212 = vld [vmem:[%s209 + $0x10] sm:$0xff]
    %v213 = vld [vmem:[%s209 + $0x18] sm:$0xff]
    %v214 = vld [vmem:[%s209 + $0x20] sm:$0xff]
    %v215 = vld [vmem:[%s209 + $0x28] sm:$0xff]
    %v216 = vld [vmem:[%s209 + $0x30] sm:$0xff]
    %v217 = vld [vmem:[%s209 + $0x38] sm:$0xff]
    %v218 = vld [vmem:[%s209 + $0x40] sm:$0xff]
    %v219 = vld [vmem:[%s209 + $0x48] sm:$0xff]
    %v220 = vld [vmem:[%s209 + $0x50] sm:$0xff]
    %v221 = vld [vmem:[%s209 + $0x58] sm:$0xff]
    %v222 = vld [vmem:[%s209 + $0x60] sm:$0xff]
    %v223 = vld [vmem:[%s209 + $0x68] sm:$0xff]
    %v224 = vld [vmem:[%s209 + $0x70] sm:$0xff]
    %v225 = vld [vmem:[%s209 + $0x78] sm:$0xff]
    %226 = vmatprep.subr.mxu0 0.0
    %227 = vmatpush1.msra.mxu0 %v210
    %228 = vmatprep.subr.mxu0 0.0
    %229 = vmatpush1.msra.mxu0 %v211
    %230 = vmatprep.subr.mxu0 0.0
    %231 = vmatpush1.msra.mxu0 %v212
    %232 = vmatprep.subr.mxu0 0.0
    %233 = vmatpush1.msra.mxu0 %v213
    %234 = vmatprep.subr.mxu0 0.0
    %235 = vmatpush1.msra.mxu0 %v214
    %236 = vmatprep.subr.mxu0 0.0
    %237 = vmatpush1.msra.mxu0 %v215
    %238 = vmatprep.subr.mxu0 0.0
    %239 = vmatpush1.msra.mxu0 %v216
    %240 = vmatprep.subr.mxu0 0.0
    %241 = vmatpush1.msra.mxu0 %v217
    %242 = vmatprep.subr.mxu0 0.0
    %243 = vmatpush1.msra.mxu0 %v218
    %244 = vmatprep.subr.mxu0 0.0
    %245 = vmatpush1.msra.mxu0 %v219
    %246 = vmatprep.subr.mxu0 0.0
    %247 = vmatpush1.msra.mxu0 %v220
    %248 = vmatprep.subr.mxu0 0.0
    %249 = vmatpush1.msra.mxu0 %v221
    %250 = vmatprep.subr.mxu0 0.0
    %251 = vmatpush1.msra.mxu0 %v222
    %252 = vmatprep.subr.mxu0 0.0
    %253 = vmatpush1.msra.mxu0 %v223
    %254 = vmatprep.subr.mxu0 0.0
    %255 = vmatpush1.msra.mxu0 %v224
    %256 = vmatprep.subr.mxu0 0.0
    %257 = vmatpush1.msra.mxu0 %v225
    %258 = vmatprep.subr.mxu0 0.0
    %259 = vmatpush1.msra.mxu0 0.0
    %260 = vmatprep.subr.mxu0 0.0
    %261 = vmatpush1.msra.mxu0 0.0
    %262 = vmatprep.subr.mxu0 0.0
    %263 = vmatpush1.msra.mxu0 0.0
    %264 = vmatprep.subr.mxu0 0.0
    %265 = vmatpush1.msra.mxu0 0.0
    %266 = vmatprep.subr.mxu0 0.0
    %267 = vmatpush1.msra.mxu0 0.0
    %268 = vmatprep.subr.mxu0 0.0
    %269 = vmatpush1.msra.mxu0 0.0
    %270 = vmatprep.subr.mxu0 0.0
    %271 = vmatpush1.msra.mxu0 0.0
    %272 = vmatprep.subr.mxu0 0.0
    %273 = vmatpush1.msra.mxu0 0.0
    %274 = vmatprep.subr.mxu0 0.0
    %275 = vmatpush1.msra.mxu0 0.0
    %276 = vmatprep.subr.mxu0 0.0
    %277 = vmatpush1.msra.mxu0 0.0
    %278 = vmatprep.subr.mxu0 0.0
    %279 = vmatpush1.msra.mxu0 0.0
    %280 = vmatprep.subr.mxu0 0.0
    %281 = vmatpush1.msra.mxu0 0.0
    %282 = vmatprep.subr.mxu0 0.0
    %283 = vmatpush1.msra.mxu0 0.0
    %284 = vmatprep.subr.mxu0 0.0
    %285 = vmatpush1.msra.mxu0 0.0
    %286 = vmatprep.subr.mxu0 0.0
    %287 = vmatpush1.msra.mxu0 0.0
    %288 = vmatprep.subr.mxu0 0.0
    %289 = vmatpush1.msra.mxu0 0.0
    %290 = vmatprep.mubr.f32.mxu0 0.0
    %291 = vmatmul.mubr.f32.gmra.mrb[0].mxu0 %v208
    %v292 = vpop.f32.mrb[0].mxu0
    %v293 = vadd.f32 0.0, %v292
    %v294 = vpop.f32.mrb[0].mxu0
    %295 = vdwg.mxu0
    %v296 = vmax.f32 %v293, 0.0
    %s297 = scalar_lea.vmem [#allocation3], 384
    %v298 = vld [vmem:[%s297] sm:$0xff]
    %v299 = vld [vmem:[%s297 + $0x8] sm:$0xff]
    %v300 = vld [vmem:[%s297 + $0x10] sm:$0xff]
    %v301 = vld [vmem:[%s297 + $0x18] sm:$0xff]
    %v302 = vld [vmem:[%s297 + $0x20] sm:$0xff]
    %v303 = vld [vmem:[%s297 + $0x28] sm:$0xff]
    %v304 = vld [vmem:[%s297 + $0x30] sm:$0xff]
    %v305 = vld [vmem:[%s297 + $0x38] sm:$0xff]
    %v306 = vld [vmem:[%s297 + $0x40] sm:$0xff]
    %v307 = vld [vmem:[%s297 + $0x48] sm:$0xff]
    %v308 = vld [vmem:[%s297 + $0x50] sm:$0xff]
    %v309 = vld [vmem:[%s297 + $0x58] sm:$0xff]
    %v310 = vld [vmem:[%s297 + $0x60] sm:$0xff]
    %v311 = vld [vmem:[%s297 + $0x68] sm:$0xff]
    %v312 = vld [vmem:[%s297 + $0x70] sm:$0xff]
    %v313 = vld [vmem:[%s297 + $0x78] sm:$0xff]
    %314 = vmatprep.subr.mxu0 0.0
    %315 = vmatpush1.msra.mxu0 %v298
    %316 = vmatprep.subr.mxu0 0.0
    %317 = vmatpush1.msra.mxu0 %v299
    %318 = vmatprep.subr.mxu0 0.0
    %319 = vmatpush1.msra.mxu0 %v300
    %320 = vmatprep.subr.mxu0 0.0
    %321 = vmatpush1.msra.mxu0 %v301
    %322 = vmatprep.subr.mxu0 0.0
    %323 = vmatpush1.msra.mxu0 %v302
    %324 = vmatprep.subr.mxu0 0.0
    %325 = vmatpush1.msra.mxu0 %v303
    %326 = vmatprep.subr.mxu0 0.0
    %327 = vmatpush1.msra.mxu0 %v304
    %328 = vmatprep.subr.mxu0 0.0
    %329 = vmatpush1.msra.mxu0 %v305
    %330 = vmatprep.subr.mxu0 0.0
    %331 = vmatpush1.msra.mxu0 %v306
    %332 = vmatprep.subr.mxu0 0.0
    %333 = vmatpush1.msra.mxu0 %v307
    %334 = vmatprep.subr.mxu0 0.0
    %335 = vmatpush1.msra.mxu0 %v308
    %336 = vmatprep.subr.mxu0 0.0
    %337 = vmatpush1.msra.mxu0 %v309
    %338 = vmatprep.subr.mxu0 0.0
    %339 = vmatpush1.msra.mxu0 %v310
    %340 = vmatprep.subr.mxu0 0.0
    %341 = vmatpush1.msra.mxu0 %v311
    %342 = vmatprep.subr.mxu0 0.0
    %343 = vmatpush1.msra.mxu0 %v312
    %344 = vmatprep.subr.mxu0 0.0
    %345 = vmatpush1.msra.mxu0 %v313
    %346 = vmatprep.subr.mxu0 0.0
    %347 = vmatpush1.msra.mxu0 0.0
    %348 = vmatprep.subr.mxu0 0.0
    %349 = vmatpush1.msra.mxu0 0.0
    %350 = vmatprep.subr.mxu0 0.0
    %351 = vmatpush1.msra.mxu0 0.0
    %352 = vmatprep.subr.mxu0 0.0
    %353 = vmatpush1.msra.mxu0 0.0
    %354 = vmatprep.subr.mxu0 0.0
    %355 = vmatpush1.msra.mxu0 0.0
    %356 = vmatprep.subr.mxu0 0.0
    %357 = vmatpush1.msra.mxu0 0.0
    %358 = vmatprep.subr.mxu0 0.0
    %359 = vmatpush1.msra.mxu0 0.0
    %360 = vmatprep.subr.mxu0 0.0
    %361 = vmatpush1.msra.mxu0 0.0
    %362 = vmatprep.subr.mxu0 0.0
    %363 = vmatpush1.msra.mxu0 0.0
    %364 = vmatprep.subr.mxu0 0.0
    %365 = vmatpush1.msra.mxu0 0.0
    %366 = vmatprep.subr.mxu0 0.0
    %367 = vmatpush1.msra.mxu0 0.0
    %368 = vmatprep.subr.mxu0 0.0
    %369 = vmatpush1.msra.mxu0 0.0
    %370 = vmatprep.subr.mxu0 0.0
    %371 = vmatpush1.msra.mxu0 0.0
    %372 = vmatprep.subr.mxu0 0.0
    %373 = vmatpush1.msra.mxu0 0.0
    %374 = vmatprep.subr.mxu0 0.0
    %375 = vmatpush1.msra.mxu0 0.0
    %376 = vmatprep.subr.mxu0 0.0
    %377 = vmatpush1.msra.mxu0 0.0
    %378 = vmatprep.mubr.f32.mxu0 0.0
    %379 = vmatmul.mubr.f32.gmra.mrb[0].mxu0 %v296
    %v380 = vpop.f32.mrb[0].mxu0
    %v381 = vadd.f32 0.0, %v380
    %v382 = vpop.f32.mrb[0].mxu0
    %383 = vdwg.mxu0
    %vm384 = vcmask 64512
    %385 = vst.msk [vmem:[%s2] sm:$0xff] %vm384, %v381
    // Predicated region
    $region14: #{bigger_nn_forward.1} parent=1 // pred_check
      _
    $region15: #{bigger_nn_forward.1} parent=1 // pred_check_branch
      %387 = sbr.rel (0) target = $region17
    $region16: #{bigger_nn_forward.1} parent=1 // pred_region
      _
    $region17: #{bigger_nn_forward.1} parent=1 // pred_fallthru
      _
    // Predicated region
    $region18: #{bigger_nn_forward.1} parent=1 // pred_check
      _
    $region19: #{bigger_nn_forward.1} parent=1 // pred_check_branch
      %389 = sbr.rel (0) target = $region21
    $region20: #{bigger_nn_forward.1} parent=1 // pred_region
      _
    $region21: #{bigger_nn_forward.1} parent=1 // pred_fallthru
      _
    %390 = vsyncpa [#allocation4], 1

</llo_original>
